<compile_context>
chip_gen: v7x
topology: tpu7x:2x2x1
jax: 0.10.0
libtpu: 0.0.40
codegen_flags: <defaults>
</compile_context>

<pallas_src>
import functools

import jax
import jax.numpy as jnp
import numpy as np
from jax.experimental import pallas as pl
from jax.experimental.pallas import tpu as pltpu


# ----------------------- parameter-side glue (plain JAX) ---------------------

def skew_symmetric(vec, block_size):
    """vec: (r, n_elements) -> skew-symmetric (r, block_size, block_size)."""
    r = vec.shape[0]
    rows, cols = jnp.triu_indices(block_size, k=1)
    mat = jnp.zeros((r, block_size, block_size), dtype=vec.dtype)
    mat = mat.at[:, rows, cols].set(vec)
    return mat - jnp.swapaxes(mat, -1, -2)


def cayley_neumann(weight, block_size, num_neumann_terms=5):
    """R = I + 2Q + 2Q^2 + ... + 2Q^(num_neumann_terms-1), Q skew-symmetric."""
    q = skew_symmetric(weight, block_size)                       # (r, k, k)
    r = weight.shape[0]
    R = jnp.broadcast_to(jnp.eye(block_size, dtype=weight.dtype),
                         (r, block_size, block_size))
    if num_neumann_terms > 1:
        R = R + 2.0 * q
        if num_neumann_terms > 2:
            q_power = jnp.matmul(q, q)
            R = R + 2.0 * q_power
            for _ in range(3, num_neumann_terms):
                q_power = jnp.matmul(q_power, q)
                R = R + 2.0 * q_power
    return R                                                      # (r, k, k)


def _grouped_block_diag(R, tile_f):
    """(r, k, k) per-block rotations -> (G, tF, tF) grouped block-diagonal."""
    r, k, _ = R.shape
    F = r * k
    G = F // tile_f
    bpg = tile_f // k                                 # OFT blocks per feature tile
    R4 = R.reshape(G, bpg, k, k)
    eye_b = jnp.eye(bpg, dtype=R.dtype)
    # out[g, b, i, c, j] = R4[g, b, i, j] * (b == c)  -> block-diag per group
    return jnp.einsum('gbij,bc->gbicj', R4, eye_b).reshape(G, tile_f, tile_f)


def _pick_tile_f(F, k):
    # Prefer a lane-dense feature tile: a divisor of F that is a multiple of
    # 128 and of the OFT block size k (so grouped block-diag stays aligned).
    for cand in (512, 384, 256, 128):
        if F % cand == 0 and cand % k == 0:
            return cand
    return F      # fall back: one group covering the full feature dim


def _pick_tile_m(M):
    if M <= 512:
        return M  # block dim == full array dim is always legal
    return 512    # multiple of 8; partial final block is masked by Pallas


# ------------------------------ Pallas kernel --------------------------------

def _oft_rotation_kernel(r_ref, x_ref, o_ref):
    # r_ref: (1, tF, tF) grouped block-diagonal rotation (resident over M tiles)
    # x_ref: (tM, tF)    native-layout activation tile
    # o_ref: (tM, tF)    lane-dense output tile
    o_ref[...] = jnp.dot(
        x_ref[...], r_ref[0], preferred_element_type=jnp.float32
    ).astype(o_ref.dtype)


@functools.partial(jax.jit,
                   static_argnames=("r", "block_size", "num_neumann_terms"))
def oft_rotation_forward(x, weight, *, r, block_size, num_neumann_terms=5):
    """Pallas implementation of OFTRotationModule.forward.

    x:      (..., r*block_size)  (the PyTorch module uses (B, C, r*block_size))
    weight: (r, n_elements) with n_elements = block_size*(block_size-1)//2
    """
    orig_shape = x.shape
    k = block_size
    F = r * k
    assert orig_shape[-1] == F, "last dim of x must equal r * block_size"
    M = int(np.prod(orig_shape[:-1]))

    # Tiny parameter-side precompute (once per call, O(r*k^3)).
    R = cayley_neumann(weight, k, num_neumann_terms)              # (r, k, k)

    tF = _pick_tile_f(F, k)
    tM = _pick_tile_m(M)
    G = F // tF
    grid_m = pl.cdiv(M, tM)

    R_grouped = _grouped_block_diag(R, tF)                        # (G, tF, tF)
    if x.dtype == jnp.bfloat16:
        # MXU consumes bf16 natively; keep the accumulator f32 in the kernel.
        R_grouped = R_grouped.astype(jnp.bfloat16)

    x2d = x.reshape(M, F)          # contiguous reshape: no HBM transpose

    out = pl.pallas_call(
        _oft_rotation_kernel,
        out_shape=jax.ShapeDtypeStruct((M, F), x.dtype),
        grid=(G, grid_m),          # inner loop over M tiles keeps R resident
        in_specs=[
            pl.BlockSpec((1, tF, tF), lambda g, i: (g, 0, 0)),    # rotation
            pl.BlockSpec((tM, tF), lambda g, i: (i, g)),          # activations
        ],
        out_specs=pl.BlockSpec((tM, tF), lambda g, i: (i, g)),
        compiler_params=pltpu.CompilerParams(
            dimension_semantics=("parallel", "parallel")),
    )(R_grouped, x2d)

    return out.reshape(orig_shape)


# ----------------------------- pure-JAX reference ----------------------------

def oft_rotation_reference(x, weight, *, r, block_size, num_neumann_terms=5):
    R = cayley_neumann(weight, block_size, num_neumann_terms)     # (r, k, k)
    orig_shape = x.shape
    x_r = x.reshape(*orig_shape[:-1], r, block_size)
    y = jnp.einsum('...rk,rkc->...rc', x_r, R)
    return y.reshape(orig_shape)


# ----------------------------------- main ------------------------------------

if __name__ == "__main__":
    # Module config: in_features = r * block_size = 128 (lane-dense feature dim)
    r = 4
    block_size = 32
    n_elements = block_size * (block_size - 1) // 2               # 496
    in_features = r * block_size                                  # 128

    batch, channels = 2, 4                                        # M = B*C = 8

    key = jax.random.PRNGKey(0)
    k_w, k_x = jax.random.split(key)
    weight = 0.02 * jax.random.normal(k_w, (r, n_elements), dtype=jnp.float32)
    x = jax.random.normal(k_x, (batch, channels, in_features),
                          dtype=jnp.float32)

    out = oft_rotation_forward(x, weight, r=r, block_size=block_size)
    out = jax.block_until_ready(out)

    ref = oft_rotation_reference(x, weight, r=r, block_size=block_size)
    np.testing.assert_allclose(np.asarray(out), np.asarray(ref),
                               rtol=1e-5, atol=1e-5)
    assert out.shape == x.shape and out.dtype == x.dtype

    print("KERNEL_OK")
</pallas_src>

<mosaic_0001>
module attributes {stable_mosaic.version = 11 : i64} {
  func.func private @main(%arg0: i32) attributes {dimension_semantics = [#tpu.dimension_semantics<core_parallel>], iteration_bounds = array<i64: 2>, tpu.core_type = #tpu.core_type<sc_scalar_subcore>, window_params = []} {
    return
  }
}

module attributes {stable_mosaic.version = 11 : i64} {
  func.func private @main(%arg0: i32) attributes {dimension_semantics = [#tpu.dimension_semantics<core_parallel>], iteration_bounds = array<i64: 2>, tpu.core_type = #tpu.core_type<sc_scalar_subcore>, window_params = []} {
    return
  }
}

module attributes {stable_mosaic.version = 11 : i64} {
  func.func @_oft_rotation_kernel(%arg0: i32, %arg1: i32, %arg2: memref<1x128x128xf32, #tpu.memory_space<vmem>>, %arg3: memref<8x128xf32, #tpu.memory_space<vmem>>, %arg4: memref<8x128xf32, #tpu.memory_space<vmem>>) attributes {dimension_semantics = [#tpu.dimension_semantics<parallel>, #tpu.dimension_semantics<parallel>], iteration_bounds = array<i64: 1, 1>, scalar_prefetch = 0 : i64, scratch_operands = 0 : i64, tpu.core_type = #tpu.core_type<tc>, window_params = [{transform_indices = @transform_0, window_bounds = array<i64: 1, 128, 128>}, {transform_indices = @transform_1, window_bounds = array<i64: 8, 128>}, {transform_indices = @transform_2, window_bounds = array<i64: 8, 128>}]} {
    %c0 = arith.constant 0 : index
    %c0_0 = arith.constant 0 : index
    %0 = vector.load %arg3[%c0, %c0_0] : memref<8x128xf32, #tpu.memory_space<vmem>>, vector<8x128xf32>
    %c0_1 = arith.constant 0 : index
    %c0_2 = arith.constant 0 : index
    %c0_3 = arith.constant 0 : index
    %1 = vector.load %arg2[%c0_1, %c0_2, %c0_3] : memref<1x128x128xf32, #tpu.memory_space<vmem>>, vector<1x128x128xf32>
    %2 = vector.shape_cast %1 : vector<1x128x128xf32> to vector<128x128xf32>
    %cst = arith.constant dense<0.000000e+00> : vector<8x128xf32>
    %3 = tpu.matmul %0, %2, %cst {dimension_numbers = #tpu.dot_dimension_numbers<[1], [0], [0], [1], [0, 0, 1, 1], [], []>} : vector<8x128xf32>, vector<128x128xf32>, vector<8x128xf32> -> vector<8x128xf32>
    %c0_4 = arith.constant 0 : index
    %c0_5 = arith.constant 0 : index
    %4 = vector.load %arg4[%c0_4, %c0_5] : memref<8x128xf32, #tpu.memory_space<vmem>>, vector<8x128xf32>
    tpu.vector_store %arg4[%c0_4, %c0_5], %3 {strides = array<i32>} : memref<8x128xf32, #tpu.memory_space<vmem>>, vector<8x128xf32>,
    return
  }
  func.func @transform_0(%arg0: i32, %arg1: i32) -> (i32, i32, i32) {
    %c0_i32 = arith.constant 0 : i32
    %c0_i32_0 = arith.constant 0 : i32
    %c0_i32_1 = arith.constant 0 : i32
    return %arg0, %c0_i32, %c0_i32_0 : i32, i32, i32
  }
  func.func @transform_1(%arg0: i32, %arg1: i32) -> (i32, i32) {
    %c0_i32 = arith.constant 0 : i32
    return %arg1, %arg0 : i32, i32
  }
  func.func @transform_2(%arg0: i32, %arg1: i32) -> (i32, i32) {
    %c0_i32 = arith.constant 0 : i32
    return %arg1, %arg0 : i32, i32
  }
}

</mosaic_0001>

<llo_original>
// kernel: oft_rotation_forward.1
$region0: #{oft_rotation_forward.1}
  #allocation0 [shape = 'u32[]', space=smem, size = 0x4, offset = 0x4, fixed_abs, tag = 'smem constant byte address 0x4 - core index']
  #allocation1 [shape = 'u32[144,128]{1,0:T(1,128)}', space=vmem, size = 0x12000, scoped, tag = 'internal scratch']
  %s0 = inlined_call_operand.vmem [shape: f32[1,128,128], index: 0, kind: input, shape index: {}]
  %s1 = inlined_call_operand.vmem [shape: f32[8,128], index: 1, kind: input, shape index: {}]
  %s2 = inlined_call_operand.hbm [shape: f32[8,128], index: 2, kind: output, shape index: {}]
  %s3 = sld [smem:[#allocation0]]
  $region18: #{oft_rotation_forward.1} parent=0
    _
  %s5 = ssub.s32 1, %s3
  %s6 = scalar_select 0, %s5, %s3
  $region1: #{oft_rotation_forward.1} parent=0
    #allocation2 [shape = 'u8[4096]{0}', space=vmem, size = 0x1000, scoped, tag = 'output window, operand 0, single buffered']
    #allocation3 [shape = 's32[1]{0}', space=sflag, size = 0x4, scoped, tag = 'scoped memory for oft_rotation_forward.1']
    %7 = vsyncpa [#allocation3], 0
    // Predicated region
    $region2: #{oft_rotation_forward.1} parent=1 // pred_check
      _
    $region3: #{oft_rotation_forward.1} parent=1 // pred_check_branch
      %9 = sbr.rel (0) target = $region5
    $region4: #{oft_rotation_forward.1} parent=1 // pred_region
      _
    $region5: #{oft_rotation_forward.1} parent=1 // pred_fallthru
      _
    // Predicated region
    $region6: #{oft_rotation_forward.1} parent=1 // pred_check
      _
    $region7: #{oft_rotation_forward.1} parent=1 // pred_check_branch
      %11 = sbr.rel (0) target = $region9
    $region8: #{oft_rotation_forward.1} parent=1 // pred_region
      _
    $region9: #{oft_rotation_forward.1} parent=1 // pred_fallthru
      _
    %v12 = vld [vmem:[%s1] sm:$0xff]
    %v13 = vld [vmem:[%s0] sm:$0xff]
    %v14 = vld [vmem:[%s0 + $0x8] sm:$0xff]
    %v15 = vld [vmem:[%s0 + $0x10] sm:$0xff]
    %v16 = vld [vmem:[%s0 + $0x18] sm:$0xff]
    %v17 = vld [vmem:[%s0 + $0x20] sm:$0xff]
    %v18 = vld [vmem:[%s0 + $0x28] sm:$0xff]
    %v19 = vld [vmem:[%s0 + $0x30] sm:$0xff]
    %v20 = vld [vmem:[%s0 + $0x38] sm:$0xff]
    %v21 = vld [vmem:[%s0 + $0x40] sm:$0xff]
    %v22 = vld [vmem:[%s0 + $0x48] sm:$0xff]
    %v23 = vld [vmem:[%s0 + $0x50] sm:$0xff]
    %v24 = vld [vmem:[%s0 + $0x58] sm:$0xff]
    %v25 = vld [vmem:[%s0 + $0x60] sm:$0xff]
    %v26 = vld [vmem:[%s0 + $0x68] sm:$0xff]
    %v27 = vld [vmem:[%s0 + $0x70] sm:$0xff]
    %v28 = vld [vmem:[%s0 + $0x78] sm:$0xff]
    %29 = vmatprep.subr.mxu0 0.0
    %30 = vmatpush1.msra.mxu0 %v13
    %31 = vmatprep.subr.mxu0 0.0
    %32 = vmatpush1.msra.mxu0 %v14
    %33 = vmatprep.subr.mxu0 0.0
    %34 = vmatpush1.msra.mxu0 %v15
    %35 = vmatprep.subr.mxu0 0.0
    %36 = vmatpush1.msra.mxu0 %v16
    %37 = vmatprep.subr.mxu0 0.0
    %38 = vmatpush1.msra.mxu0 %v17
    %39 = vmatprep.subr.mxu0 0.0
    %40 = vmatpush1.msra.mxu0 %v18
    %41 = vmatprep.subr.mxu0 0.0
    %42 = vmatpush1.msra.mxu0 %v19
    %43 = vmatprep.subr.mxu0 0.0
    %44 = vmatpush1.msra.mxu0 %v20
    %45 = vmatprep.subr.mxu0 0.0
    %46 = vmatpush1.msra.mxu0 %v21
    %47 = vmatprep.subr.mxu0 0.0
    %48 = vmatpush1.msra.mxu0 %v22
    %49 = vmatprep.subr.mxu0 0.0
    %50 = vmatpush1.msra.mxu0 %v23
    %51 = vmatprep.subr.mxu0 0.0
    %52 = vmatpush1.msra.mxu0 %v24
    %53 = vmatprep.subr.mxu0 0.0
    %54 = vmatpush1.msra.mxu0 %v25
    %55 = vmatprep.subr.mxu0 0.0
    %56 = vmatpush1.msra.mxu0 %v26
    %57 = vmatprep.subr.mxu0 0.0
    %58 = vmatpush1.msra.mxu0 %v27
    %59 = vmatprep.subr.mxu0 0.0
    %60 = vmatpush1.msra.mxu0 %v28
    %61 = vmatprep.subr.mxu0 0.0
    %62 = vmatpush1.msra.mxu0 0.0
    %63 = vmatprep.subr.mxu0 0.0
    %64 = vmatpush1.msra.mxu0 0.0
    %65 = vmatprep.subr.mxu0 0.0
    %66 = vmatpush1.msra.mxu0 0.0
    %67 = vmatprep.subr.mxu0 0.0
    %68 = vmatpush1.msra.mxu0 0.0
    %69 = vmatprep.subr.mxu0 0.0
    %70 = vmatpush1.msra.mxu0 0.0
    %71 = vmatprep.subr.mxu0 0.0
    %72 = vmatpush1.msra.mxu0 0.0
    %73 = vmatprep.subr.mxu0 0.0
    %74 = vmatpush1.msra.mxu0 0.0
    %75 = vmatprep.subr.mxu0 0.0
    %76 = vmatpush1.msra.mxu0 0.0
    %77 = vmatprep.subr.mxu0 0.0
    %78 = vmatpush1.msra.mxu0 0.0
    %79 = vmatprep.subr.mxu0 0.0
    %80 = vmatpush1.msra.mxu0 0.0
    %81 = vmatprep.subr.mxu0 0.0
    %82 = vmatpush1.msra.mxu0 0.0
    %83 = vmatprep.subr.mxu0 0.0
    %84 = vmatpush1.msra.mxu0 0.0
    %85 = vmatprep.subr.mxu0 0.0
    %86 = vmatpush1.msra.mxu0 0.0
    %87 = vmatprep.subr.mxu0 0.0
    %88 = vmatpush1.msra.mxu0 0.0
    %89 = vmatprep.subr.mxu0 0.0
    %90 = vmatpush1.msra.mxu0 0.0
    %91 = vmatprep.subr.mxu0 0.0
    %92 = vmatpush1.msra.mxu0 0.0
    %93 = vmatprep.mubr.f32.mxu0 0.0
    %94 = vmatmul.mubr.f32.gmra.mrb[0].mxu0 %v12
    %v95 = vpop.f32.mrb[0].mxu0
    %v96 = vadd.f32 0.0, %v95
    %v97 = vpop.f32.mrb[0].mxu0
    %98 = vdwg.mxu0
    %99 = vst [vmem:[#allocation2] sm:$0xff] %v96
    // Predicated region
    $region10: #{oft_rotation_forward.1} parent=1 // pred_check
      _
    $region11: #{oft_rotation_forward.1} parent=1 // pred_check_branch
      %101 = sbr.rel (0) target = $region13
    $region12: #{oft_rotation_forward.1} parent=1 // pred_region
      %s103 = ssub.s32 128, 128
      %104 = vsyncadd [#allocation3], %s103
      %s106 = sshll.u32 [#allocation2], 4
      %s107 = int_to_ptr.vmem [resolvable:$true] %s106
      %109 = dma.vmem_to_hbm [thread:$0]  %s107, 128, %s2, [#allocation3]
    $region13: #{oft_rotation_forward.1} parent=1 // pred_fallthru
      _
    // Predicated region
    $region14: #{oft_rotation_forward.1} parent=1 // pred_check
      _
    $region15: #{oft_rotation_forward.1} parent=1 // pred_check_branch
      %111 = sbr.rel (0) target = $region17
    $region16: #{oft_rotation_forward.1} parent=1 // pred_region
      %112 = dma.done [#allocation3], 128
    $region17: #{oft_rotation_forward.1} parent=1 // pred_fallthru
      _
    %113 = vsyncpa [#allocation3], 1

</llo_original>
